<compile_context>
chip_gen: v6e
topology: v6e:2x2x1
jax: 0.10.0
libtpu: 0.0.40
codegen_flags: <defaults>
</compile_context>

<pallas_src>
import jax
import jax.numpy as jnp
from jax.experimental import pallas as pl
from jax.experimental.pallas import tpu as pltpu

_LANE = 128
_SUBLANE = 8


def _round_up(x: int, m: int) -> int:
    return (x + m - 1) // m * m


def _initializer_kernel(c_ref, w_ref, o_ref):
    # c_ref: [tb, c_pad]   w_ref: [c_pad, h_pad]   o_ref: [tb, h_pad]
    # Linear (no bias) on the MXU with f32 accumulation, ReLU fused into the store.
    t = jnp.dot(c_ref[...], w_ref[...], preferred_element_type=jnp.float32)
    o_ref[...] = jnp.maximum(t, 0.0).astype(o_ref.dtype)


def initializer_no_img(phi_o, c_hat, weight, *, batch_tile=32):
    """
    phi_o:  [B, phi_dim]  float32  (unused by the module's forward)
    c_hat:  [B, c_dim]    float32  one-hot class encoding
    weight: [h_dim, c_dim] float32 (nn.Linear weight, bias=False)
    returns: [B, h_dim] = relu(c_hat @ weight.T)
    """
    del phi_o  # InitializerNoIMG ignores the box features.

    B, c_dim = c_hat.shape
    h_dim = weight.shape[0]

    # Lane-dense / MXU-friendly padding: last dims -> x128, batch tile -> x8.
    c_pad = _round_up(c_dim, _LANE)
    h_pad = _round_up(h_dim, _LANE)
    tb = _round_up(min(batch_tile, max(B, _SUBLANE)), _SUBLANE)
    b_pad = _round_up(B, tb)

    c_hat_p = jnp.zeros((b_pad, c_pad), c_hat.dtype).at[:B, :c_dim].set(c_hat)
    w_t_p = jnp.zeros((c_pad, h_pad), weight.dtype).at[:c_dim, :h_dim].set(weight.T)

    n_tiles = b_pad // tb
    cost = pl.CostEstimate(
        flops=2 * b_pad * c_pad * h_pad,
        transcendentals=0,
        bytes_accessed=(b_pad * c_pad + c_pad * h_pad + b_pad * h_pad) * 4,
    )

    out = pl.pallas_call(
        _initializer_kernel,
        out_shape=jax.ShapeDtypeStruct((b_pad, h_pad), c_hat.dtype),
        grid_spec=pltpu.PrefetchScalarGridSpec(
            num_scalar_prefetch=0,
            grid=(n_tiles,),
            in_specs=[
                pl.BlockSpec((tb, c_pad), lambda i: (i, 0)),      # batch tile
                pl.BlockSpec((c_pad, h_pad), lambda i: (0, 0)),   # weight, resident
            ],
            out_specs=pl.BlockSpec((tb, h_pad), lambda i: (i, 0)),
        ),
        compiler_params=pltpu.CompilerParams(
            dimension_semantics=("parallel",),   # shard batch tiles across TCs on v7x
        ),
        cost_estimate=cost,
    )(c_hat_p, w_t_p)

    # Strip padding back to the logical shape.
    return out[:B, :h_dim]


def _reference(c_hat, weight):
    return jnp.maximum(c_hat @ weight.T, 0.0)


if __name__ == "__main__":
    key = jax.random.PRNGKey(0)
    k_phi, k_cls, k_w = jax.random.split(key, 3)

    B = 64
    phi_dim = 1024   # module default (unused by forward)
    c_dim = 90       # module default (COCO classes)
    h_dim = 128      # lane-dense hidden dim

    phi_o = jax.random.normal(k_phi, (B, phi_dim), dtype=jnp.float32)
    classes = jax.random.randint(k_cls, (B,), 0, c_dim)
    c_hat = jax.nn.one_hot(classes, c_dim, dtype=jnp.float32)

    # Deterministic nn.Linear-style init: U(-1/sqrt(c_dim), 1/sqrt(c_dim)).
    bound = 1.0 / (c_dim ** 0.5)
    weight = jax.random.uniform(
        k_w, (h_dim, c_dim), minval=-bound, maxval=bound, dtype=jnp.float32)

    out = initializer_no_img(phi_o, c_hat, weight)
    out = jax.block_until_ready(out)

    ref = _reference(c_hat, weight)
    assert out.shape == (B, h_dim)
    assert jnp.allclose(out, ref, atol=1e-5, rtol=1e-5), "mismatch vs reference"

    print("KERNEL_OK")
</pallas_src>

<mosaic_0001>
module attributes {stable_mosaic.version = 11 : i64} {
  func.func @_initializer_kernel(%arg0: i32, %arg1: memref<32x128xf32, #tpu.memory_space<vmem>>, %arg2: memref<128x128xf32, #tpu.memory_space<vmem>>, %arg3: memref<32x128xf32, #tpu.memory_space<vmem>>) attributes {dimension_semantics = [#tpu.dimension_semantics<parallel>], iteration_bounds = array<i64: 2>, scalar_prefetch = 0 : i64, scratch_operands = 0 : i64, tpu.core_type = #tpu.core_type<tc>, window_params = [{transform_indices = @transform_0, window_bounds = array<i64: 32, 128>}, {pipeline_mode = #tpu.pipeline_mode<synchronous>, transform_indices = @transform_1, window_bounds = array<i64: 128, 128>}, {transform_indices = @transform_2, window_bounds = array<i64: 32, 128>}]} {
    %c0 = arith.constant 0 : index
    %c0_0 = arith.constant 0 : index
    %0 = vector.load %arg1[%c0, %c0_0] : memref<32x128xf32, #tpu.memory_space<vmem>>, vector<32x128xf32>
    %c0_1 = arith.constant 0 : index
    %c0_2 = arith.constant 0 : index
    %1 = vector.load %arg2[%c0_1, %c0_2] : memref<128x128xf32, #tpu.memory_space<vmem>>, vector<128x128xf32>
    %cst = arith.constant dense<0.000000e+00> : vector<32x128xf32>
    %2 = tpu.matmul %0, %1, %cst {dimension_numbers = #tpu.dot_dimension_numbers<[1], [0], [0], [1], [0, 0, 1, 1], [], []>} : vector<32x128xf32>, vector<128x128xf32>, vector<32x128xf32> -> vector<32x128xf32>
    %cst_3 = arith.constant 0.000000e+00 : f32
    %3 = vector.broadcast %cst_3 : f32 to vector<32x128xf32>
    %4 = arith.maximumf %2, %3 : vector<32x128xf32>
    %c0_4 = arith.constant 0 : index
    %c0_5 = arith.constant 0 : index
    %5 = vector.load %arg3[%c0_4, %c0_5] : memref<32x128xf32, #tpu.memory_space<vmem>>, vector<32x128xf32>
    tpu.vector_store %arg3[%c0_4, %c0_5], %4 {strides = array<i32>} : memref<32x128xf32, #tpu.memory_space<vmem>>, vector<32x128xf32>,
    return
  }
  func.func @transform_0(%arg0: i32) -> (i32, i32) {
    %c0_i32 = arith.constant 0 : i32
    %c0_i32_0 = arith.constant 0 : i32
    return %arg0, %c0_i32 : i32, i32
  }
  func.func @transform_1(%arg0: i32) -> (i32, i32) {
    %c0_i32 = arith.constant 0 : i32
    %c0_i32_0 = arith.constant 0 : i32
    %c0_i32_1 = arith.constant 0 : i32
    return %c0_i32, %c0_i32_0 : i32, i32
  }
  func.func @transform_2(%arg0: i32) -> (i32, i32) {
    %c0_i32 = arith.constant 0 : i32
    %c0_i32_0 = arith.constant 0 : i32
    return %arg0, %c0_i32 : i32, i32
  }
}

</mosaic_0001>

<llo_original>
// kernel: tpu_custom_call.1
$region0: #{tpu_custom_call.1}
  #allocation0 [shape = 'u32[]', space=smem, size = 0x4, offset = 0x4, fixed_abs, tag = 'smem constant byte address 0x4 - core index']
  #allocation1 [shape = 'u32[144,128]{1,0:T(1,128)}', space=vmem, size = 0x12000, scoped, tag = 'internal scratch']
  %s0 = inlined_call_operand.hbm [shape: f32[64,128], index: 0, kind: input, shape index: {}]
  %s1 = inlined_call_operand.hbm [shape: f32[128,128], index: 1, kind: input, shape index: {}]
  %s2 = inlined_call_operand.hbm [shape: f32[64,128], index: 2, kind: output, shape index: {}]
  %s3 = sld [smem:[#allocation0]]
  $region49: #{tpu_custom_call.1} parent=0
    _
  %s5 = ssub.s32 1, %s3
  %s6 = scalar_select 0, %s5, %s3
  $region1: #{tpu_custom_call.1} parent=0
    #allocation2 [shape = 'u8[32768]{0}', space=vmem, size = 0x8000, scoped, tag = 'input window, operand 0']
    #allocation3 [shape = 's32[2]{0}', space=sflag, size = 0x8, scoped, tag = 'scoped memory for tpu_custom_call.1']
    #allocation4 [shape = 's32[2]{0}', space=sflag, size = 0x8, scoped, tag = 'scoped memory for tpu_custom_call.1']
    #allocation5 [shape = 'u8[65536]{0}', space=vmem, size = 0x10000, scoped, tag = 'input window, operand 1, single buffered']
    #allocation6 [shape = 's32[1]{0}', space=sflag, size = 0x4, scoped, tag = 'scoped memory for tpu_custom_call.1']
    #allocation7 [shape = 'u8[32768]{0}', space=vmem, size = 0x8000, scoped, tag = 'output window, operand 0']
    %7 = vsyncpa [#allocation3], 0
    %s8 = scalar_lea.sflag [#allocation3], 1
    %9 = vsyncpa %s8, 0
    %10 = vsyncpa [#allocation6], 0
    %11 = vsyncpa [#allocation4], 0
    %s12 = scalar_lea.sflag [#allocation4], 1
    %13 = vsyncpa %s12, 0
    loop: start=0, step=1, limit=4
    $region2: #{tpu_custom_call.1} parent=1 // loop_pre_header
      _
    $region3: #{tpu_custom_call.1} parent=1 // loop_header
      %s15 = sphi 0, %s19
      %p16 = scmp.ge.s32.totalorder %s15, 4
      %s25 = sphi 0, %s27
      %s28 = sphi 0, %s25
      %s29 = sphi 0, %s28
      %s45 = sphi 0, %s29
      %s49 = sphi 0, %s49
      %s51 = sphi 0, %s49
      %s52 = sphi 0, %s51
      %s66 = sphi 0, %s52
      %s72 = sphi 0, %s74
      %s75 = sphi 0, %s72
      %s76 = sphi 0, %s75
      %s92 = sphi 0, %s76
    $region4: #{tpu_custom_call.1} parent=1 // loop_header_branch
      %18 = sbr.rel (%p16) target = $region8
    $region5: #{tpu_custom_call.1} parent=1 // loop_body
      %s20 = ssub.s32 %s15, 1
      %s21 = ssub.s32 %s15, 2
      %s22 = sadd.s32 %s15, 1
      %s23 = ssub.s32 %s15, %s22
      %p24 = scmp.eq.s32.totalorder %s23, 0
      %s26 = sadd.s32 %s25, 1
      %s27 = scalar_select %p24, %s25, %s26
      %p30 = pneg %p24
      %p31 = scmp.eq.s32.totalorder %s15, 1
      %p32 = por %p30, %p31
      %p33 = scmp.ne.s32.totalorder %s25, %s28
      %p34 = scmp.eq.s32.totalorder %s15, 0
      %p35 = por %p33, %p34
      %p36 = scmp.ne.s32.totalorder %s25, %s28
      %p37 = scmp.eq.s32.totalorder %s20, 1
      %p38 = por %p36, %p37
      %p39 = scmp.ne.s32.totalorder %s28, %s29
      %p40 = scmp.eq.s32.totalorder %s20, 0
      %p41 = por %p39, %p40
      %p42 = scmp.ne.s32.totalorder %s28, %s29
      %p43 = scmp.eq.s32.totalorder %s21, 1
      %p44 = por %p42, %p43
      %p46 = scmp.ne.s32.totalorder %s29, %s45
      %p47 = scmp.eq.s32.totalorder %s21, 0
      %p48 = por %p46, %p47
      %s50 = sadd.s32 %s49, 1
      %p53 = scmp.eq.s32.totalorder %s15, 1
      %p54 = scmp.ne.s32.totalorder %s49, %s51
      %p55 = scmp.eq.s32.totalorder %s15, 0
      %p56 = por %p54, %p55
      %p57 = scmp.ne.s32.totalorder %s49, %s51
      %p58 = scmp.eq.s32.totalorder %s20, 1
      %p59 = por %p57, %p58
      %p60 = scmp.ne.s32.totalorder %s51, %s52
      %p61 = scmp.eq.s32.totalorder %s20, 0
      %p62 = por %p60, %p61
      %p63 = scmp.ne.s32.totalorder %s51, %s52
      %p64 = scmp.eq.s32.totalorder %s21, 1
      %p65 = por %p63, %p64
      %p67 = scmp.ne.s32.totalorder %s52, %s66
      %p68 = scmp.eq.s32.totalorder %s21, 0
      %p69 = por %p67, %p68
      %s70 = ssub.s32 %s15, %s22
      %p71 = scmp.eq.s32.totalorder %s70, 0
      %s73 = sadd.s32 %s72, 1
      %s74 = scalar_select %p71, %s72, %s73
      %p77 = pneg %p71
      %p78 = scmp.eq.s32.totalorder %s15, 1
      %p79 = por %p77, %p78
      %p80 = scmp.ne.s32.totalorder %s72, %s75
      %p81 = scmp.eq.s32.totalorder %s15, 0
      %p82 = por %p80, %p81
      %p83 = scmp.ne.s32.totalorder %s72, %s75
      %p84 = scmp.eq.s32.totalorder %s20, 1
      %p85 = por %p83, %p84
      %p86 = scmp.ne.s32.totalorder %s75, %s76
      %p87 = scmp.eq.s32.totalorder %s20, 0
      %p88 = por %p86, %p87
      %p89 = scmp.ne.s32.totalorder %s75, %s76
      %p90 = scmp.eq.s32.totalorder %s21, 1
      %p91 = por %p89, %p90
      %p93 = scmp.ne.s32.totalorder %s76, %s92
      %p94 = scmp.eq.s32.totalorder %s21, 0
      %p95 = por %p93, %p94
      %p96 = scmp.le.s32.totalorder 1, %s15
      %p97 = scmp.lt.s32.totalorder %s15, 3
      %p98 = pnand %p96, %p97
      %p99 = pneg %p98
      // Predicated region
      $region9: #{tpu_custom_call.1} parent=5 // pred_check
        _
      $region10: #{tpu_custom_call.1} parent=5 // pred_check_branch
        %101 = sbr.rel (%p98) target = $region12
      $region11: #{tpu_custom_call.1} parent=5 // pred_region
        %s102 = ssub.s32 %s15, 1
        // Predicated region
        $region13: #{tpu_custom_call.1} parent=11 // pred_check
          %p103 = pneg %p62
        $region14: #{tpu_custom_call.1} parent=11 // pred_check_branch
          %105 = sbr.rel (%p103) target = $region16
        $region15: #{tpu_custom_call.1} parent=11 // pred_region
          %s107 = ssub.s32 2048, 2048
          %108 = vsyncadd [#allocation6], %s107
          %s109 = sshll.u32 [#allocation5], 4
          %s110 = int_to_ptr.vmem [resolvable:$true] %s109
          %115 = dma.hbm_to_vmem [thread:$0]  %s1, 2048, %s110, [#allocation6], 128, 128, 8
        $region16: #{tpu_custom_call.1} parent=11 // pred_fallthru
          _
      $region12: #{tpu_custom_call.1} parent=5 // pred_fallthru
        _
      %p116 = scmp.lt.s32.totalorder %s15, 2
      // Predicated region
      $region17: #{tpu_custom_call.1} parent=5 // pred_check
        %p117 = pneg %p116
      $region18: #{tpu_custom_call.1} parent=5 // pred_check_branch
        %119 = sbr.rel (%p117) target = $region20
      $region19: #{tpu_custom_call.1} parent=5 // pred_region
        // Predicated region
        $region21: #{tpu_custom_call.1} parent=19 // pred_check
          %p120 = pneg %p35
        $region22: #{tpu_custom_call.1} parent=19 // pred_check_branch
          %122 = sbr.rel (%p120) target = $region24
        $region23: #{tpu_custom_call.1} parent=19 // pred_region
          %s123 = sand.u32 %s25, 1
          %s124 = scalar_lea.sflag [#allocation3], %s123
          %s125 = sand.u32 %s25, 1
          %s126 = smul.addr %s125, 32
          %s127 = scalar_lea.vmem [#allocation2], %s126
          %s128 = smul.u32 4, %s15
          %s130 = ssub.s32 512, 512
          %131 = vsyncadd %s124, %s130
          %s132 = smul.addr %s128, 128
          %s133 = scalar_lea.hbm %s0, %s132
          %s134 = sshll.u32 %s127, 4
          %s135 = int_to_ptr.vmem [resolvable:$true] %s134
          %140 = dma.hbm_to_vmem [thread:$0]  %s133, 512, %s135, %s124, 128, 128, 8
        $region24: #{tpu_custom_call.1} parent=19 // pred_fallthru
          _
      $region20: #{tpu_custom_call.1} parent=5 // pred_fallthru
        _
      %p141 = scmp.le.s32.totalorder 1, %s15
      %p142 = scmp.lt.s32.totalorder %s15, 3
      %p143 = pnand %p141, %p142
      %p144 = pneg %p143
      // Predicated region
      $region25: #{tpu_custom_call.1} parent=5 // pred_check
        _
      $region26: #{tpu_custom_call.1} parent=5 // pred_check_branch
        %146 = sbr.rel (%p143) target = $region28
      $region27: #{tpu_custom_call.1} parent=5 // pred_region
        %s147 = ssub.s32 %s15, 1
        %s148 = sand.u32 %s28, 1
        %s149 = scalar_lea.sflag [#allocation3], %s148
        %s150 = sand.u32 %s28, 1
        %s151 = smul.addr %s150, 32
        %s152 = scalar_lea.vmem [#allocation2], %s151
        // Predicated region
        $region29: #{tpu_custom_call.1} parent=27 // pred_check
          %p153 = pneg %p41
        $region30: #{tpu_custom_call.1} parent=27 // pred_check_branch
          %155 = sbr.rel (%p153) target = $region32
        $region31: #{tpu_custom_call.1} parent=27 // pred_region
          %156 = dma.done %s149, 512
        $region32: #{tpu_custom_call.1} parent=27 // pred_fallthru
          _
        // Predicated region
        $region33: #{tpu_custom_call.1} parent=27 // pred_check
          %p157 = pneg %p62
        $region34: #{tpu_custom_call.1} parent=27 // pred_check_branch
          %159 = sbr.rel (%p157) target = $region36
        $region35: #{tpu_custom_call.1} parent=27 // pred_region
          %160 = dma.done [#allocation6], 2048
        $region36: #{tpu_custom_call.1} parent=27 // pred_fallthru
          _
        %s161 = sand.u32 %s28, 1
        %s162 = scalar_lea.sflag [#allocation3], %s161
        %s163 = sand.u32 %s28, 1
        %s164 = smul.addr %s163, 32
        %s165 = scalar_lea.vmem [#allocation2], %s164
        %p166 = pneg %p41
        %p167 = pneg %p38
        %p168 = pneg %p62
        %p169 = pneg %p59
        %p170 = pneg %p88
        %p171 = pneg %p85
        %s172 = sand.u32 %s75, 1
        %s173 = scalar_lea.sflag [#allocation4], %s172
        %s174 = sand.u32 %s75, 1
        %s175 = smul.addr %s174, 32
        %s176 = scalar_lea.vmem [#allocation7], %s175
        %s177 = smul.u32 4, %s20
        %s178 = smul.u32 4, %s20
        %v179 = vld [vmem:[%s152] sm:$0xff]
        %v180 = vld [vmem:[%s152 + $0x8] sm:$0xff]
        %v181 = vld [vmem:[%s152 + $0x10] sm:$0xff]
        %v182 = vld [vmem:[%s152 + $0x18] sm:$0xff]
        %v183 = vld [vmem:[#allocation5] sm:$0xff]
        %v184 = vld [vmem:[#allocation5 + $0x8] sm:$0xff]
        %v185 = vld [vmem:[#allocation5 + $0x10] sm:$0xff]
        %v186 = vld [vmem:[#allocation5 + $0x18] sm:$0xff]
        %v187 = vld [vmem:[#allocation5 + $0x20] sm:$0xff]
        %v188 = vld [vmem:[#allocation5 + $0x28] sm:$0xff]
        %v189 = vld [vmem:[#allocation5 + $0x30] sm:$0xff]
        %v190 = vld [vmem:[#allocation5 + $0x38] sm:$0xff]
        %v191 = vld [vmem:[#allocation5 + $0x40] sm:$0xff]
        %v192 = vld [vmem:[#allocation5 + $0x48] sm:$0xff]
        %v193 = vld [vmem:[#allocation5 + $0x50] sm:$0xff]
        %v194 = vld [vmem:[#allocation5 + $0x58] sm:$0xff]
        %v195 = vld [vmem:[#allocation5 + $0x60] sm:$0xff]
        %v196 = vld [vmem:[#allocation5 + $0x68] sm:$0xff]
        %v197 = vld [vmem:[#allocation5 + $0x70] sm:$0xff]
        %v198 = vld [vmem:[#allocation5 + $0x78] sm:$0xff]
        %199 = vmatprep.subr.mxu0 0.0
        %200 = vmatpush1.msra.mxu0 %v198
        %201 = vmatprep.subr.mxu0 0.0
        %202 = vmatpush1.msra.mxu0 %v197
        %203 = vmatprep.subr.mxu0 0.0
        %204 = vmatpush1.msra.mxu0 %v196
        %205 = vmatprep.subr.mxu0 0.0
        %206 = vmatpush1.msra.mxu0 %v195
        %207 = vmatprep.subr.mxu0 0.0
        %208 = vmatpush1.msra.mxu0 %v194
        %209 = vmatprep.subr.mxu0 0.0
        %210 = vmatpush1.msra.mxu0 %v193
        %211 = vmatprep.subr.mxu0 0.0
        %212 = vmatpush1.msra.mxu0 %v192
        %213 = vmatprep.subr.mxu0 0.0
        %214 = vmatpush1.msra.mxu0 %v191
        %215 = vmatprep.subr.mxu0 0.0
        %216 = vmatpush1.msra.mxu0 %v190
        %217 = vmatprep.subr.mxu0 0.0
        %218 = vmatpush1.msra.mxu0 %v189
        %219 = vmatprep.subr.mxu0 0.0
        %220 = vmatpush1.msra.mxu0 %v188
        %221 = vmatprep.subr.mxu0 0.0
        %222 = vmatpush1.msra.mxu0 %v187
        %223 = vmatprep.subr.mxu0 0.0
        %224 = vmatpush1.msra.mxu0 %v186
        %225 = vmatprep.subr.mxu0 0.0
        %226 = vmatpush1.msra.mxu0 %v185
        %227 = vmatprep.subr.mxu0 0.0
        %228 = vmatpush1.msra.mxu0 %v184
        %229 = vmatprep.subr.mxu0 0.0
        %230 = vmatpush1.msra.mxu0 %v183
        %231 = vmatprep.subr.mxu0 0.0
        %232 = vmatpush2.msra.mxu0 0.0
        %233 = vmatprep.subr.mxu0 0.0
        %234 = vmatpush2.msra.mxu0 0.0
        %235 = vmatprep.subr.mxu0 0.0
        %236 = vmatpush2.msra.mxu0 0.0
        %237 = vmatprep.subr.mxu0 0.0
        %238 = vmatpush2.msra.mxu0 0.0
        %239 = vmatprep.subr.mxu0 0.0
        %240 = vmatpush2.msra.mxu0 0.0
        %241 = vmatprep.subr.mxu0 0.0
        %242 = vmatpush2.msra.mxu0 0.0
        %243 = vmatprep.subr.mxu0 0.0
        %244 = vmatpush2.msra.mxu0 0.0
        %245 = vmatprep.subr.mxu0 0.0
        %246 = vmatpush2.msra.mxu0 0.0
        %247 = vmatprep.subr.mxu0 0.0
        %248 = vmatpush2.msra.mxu0 0.0
        %249 = vmatprep.subr.mxu0 0.0
        %250 = vmatpush2.msra.mxu0 0.0
        %251 = vmatprep.subr.mxu0 0.0
        %252 = vmatpush2.msra.mxu0 0.0
        %253 = vmatprep.subr.mxu0 0.0
        %254 = vmatpush2.msra.mxu0 0.0
        %255 = vmatprep.subr.mxu0 0.0
        %256 = vmatpush2.msra.mxu0 0.0
        %257 = vmatprep.subr.mxu0 0.0
        %258 = vmatpush2.msra.mxu0 0.0
        %259 = vmatprep.subr.mxu0 0.0
        %260 = vmatpush2.msra.mxu0 0.0
        %261 = vmatprep.subr.mxu0 0.0
        %262 = vmatpush2.msra.mxu0 0.0
        %263 = vmatprep.mubr.f32.mxu0 0.0
        %264 = vmatmul.mubr.f32.gmra.mxu0 %v179
        %v265 = vpop.f32.mrf.mxu0
        %v266 = vadd.f32 0.0, %v265
        %v267 = vpop.f32.mrf.mxu0
        %268 = vmatprep.mubr.f32.mxu0 0.0
        %269 = vmatmul.mubr.f32.gmra.mxu0 %v180
        %v270 = vpop.f32.mrf.mxu0
        %v271 = vadd.f32 0.0, %v270
        %v272 = vpop.f32.mrf.mxu0
        %273 = vmatprep.mubr.f32.mxu0 0.0
        %274 = vmatmul.mubr.f32.gmra.mxu0 %v181
        %v275 = vpop.f32.mrf.mxu0
        %v276 = vadd.f32 0.0, %v275
        %v277 = vpop.f32.mrf.mxu0
        %278 = vmatprep.mubr.f32.mxu0 0.0
        %279 = vmatmul.mubr.f32.gmra.mxu0 %v182
        %v280 = vpop.f32.mrf.mxu0
        %v281 = vadd.f32 0.0, %v280
        %v282 = vpop.f32.mrf.mxu0
        %283 = vdwg.mxu0
        %v284 = vmax.f32 %v266, 0.0
        %v285 = vmax.f32 %v271, 0.0
        %v286 = vmax.f32 %v276, 0.0
        %v287 = vmax.f32 %v281, 0.0
        %288 = vst [vmem:[%s176] sm:$0xff] %v284
        %289 = vst [vmem:[%s176 + $0x8] sm:$0xff] %v285
        %290 = vst [vmem:[%s176 + $0x10] sm:$0xff] %v286
        %291 = vst [vmem:[%s176 + $0x18] sm:$0xff] %v287
        %s292 = sand.u32 %s75, 1
        %s293 = scalar_lea.sflag [#allocation4], %s292
        %s294 = sand.u32 %s75, 1
        %s295 = smul.addr %s294, 32
        %s296 = scalar_lea.vmem [#allocation7], %s295
        // Predicated region
        $region37: #{tpu_custom_call.1} parent=27 // pred_check
          %p297 = pneg %p85
        $region38: #{tpu_custom_call.1} parent=27 // pred_check_branch
          %299 = sbr.rel (%p297) target = $region40
        $region39: #{tpu_custom_call.1} parent=27 // pred_region
          %s300 = smul.u32 4, %s20
          %s302 = ssub.s32 512, 512
          %303 = vsyncadd %s293, %s302
          %s304 = smul.addr %s300, 128
          %s305 = scalar_lea.hbm %s2, %s304
          %s306 = sshll.u32 %s296, 4
          %s307 = int_to_ptr.vmem [resolvable:$true] %s306
          %312 = dma.vmem_to_hbm [thread:$0]  %s307, 512, %s305, %s293, 128, 128, 8
        $region40: #{tpu_custom_call.1} parent=27 // pred_fallthru
          _
      $region28: #{tpu_custom_call.1} parent=5 // pred_fallthru
        _
      %p313 = scmp.le.s32.totalorder 2, %s15
      // Predicated region
      $region41: #{tpu_custom_call.1} parent=5 // pred_check
        %p314 = pneg %p313
      $region42: #{tpu_custom_call.1} parent=5 // pred_check_branch
        %316 = sbr.rel (%p314) target = $region44
      $region43: #{tpu_custom_call.1} parent=5 // pred_region
        %s317 = ssub.s32 %s15, 2
        // Predicated region
        $region45: #{tpu_custom_call.1} parent=43 // pred_check
          %p318 = pneg %p91
        $region46: #{tpu_custom_call.1} parent=43 // pred_check_branch
          %320 = sbr.rel (%p318) target = $region48
        $region47: #{tpu_custom_call.1} parent=43 // pred_region
          %s321 = sand.u32 %s76, 1
          %s322 = scalar_lea.sflag [#allocation4], %s321
          %s323 = sand.u32 %s76, 1
          %s324 = smul.addr %s323, 32
          %s325 = scalar_lea.vmem [#allocation7], %s324
          %326 = dma.done %s322, 512
        $region48: #{tpu_custom_call.1} parent=43 // pred_fallthru
          _
      $region44: #{tpu_custom_call.1} parent=5 // pred_fallthru
        _
    $region6: #{tpu_custom_call.1} parent=1 // loop_footer
      %s19 = sadd.s32 1, %s15
    $region7: #{tpu_custom_call.1} parent=1 // loop_footer_branch
      %14 = sbr.rel target = $region3
    $region8: #{tpu_custom_call.1} parent=1 // loop_exit
      _
    %327 = vsyncpa [#allocation3], 1
    %s328 = scalar_lea.sflag [#allocation3], 1
    %329 = vsyncpa %s328, 1
    %330 = vsyncpa [#allocation6], 1
    %331 = vsyncpa [#allocation4], 1
    %s332 = scalar_lea.sflag [#allocation4], 1
    %333 = vsyncpa %s332, 1

</llo_original>
